<compile_context>
chip_gen: v7x
topology: tpu7x:2x2x1
jax: 0.10.0
libtpu: 0.0.40
codegen_flags: <defaults>
</compile_context>

<pallas_src>
import jax
import jax.numpy as jnp
from jax.experimental import pallas as pl
from jax.experimental.pallas import tpu as pltpu


def critic_head_kernel(x_ref, w_ref, b_ref, o_ref):
    # (TB, H) @ (H, 1) on the MXU with f32 accumulation, scalar bias from SMEM.
    acc = jnp.dot(x_ref[...], w_ref[...], preferred_element_type=jnp.float32)
    o_ref[...] = (acc + b_ref[0, 0]).astype(o_ref.dtype)


def _round_up(x, m):
    return (x + m - 1) // m * m


def critic_head(x, w_t, b, *, max_tile_rows=1024,
                vmem_stream_budget_bytes=32 * 1024 * 1024):
    """x: (B, H) f32; w_t: (H, 1) f32; b: (1, 1) f32 -> (B, 1) f32."""
    B, H = x.shape
    elem_bytes = jnp.dtype(x.dtype).itemsize

    # --- batch tile sizing -------------------------------------------------
    # Double-buffered (TB, H) input tile must fit the VMEM stream budget.
    tb = vmem_stream_budget_bytes // (2 * H * elem_bytes)
    tb = max(8, (tb // 8) * 8)          # sublane-aligned
    tb = min(tb, max_tile_rows)         # past ~1024 rows we're at HBM roofline
    tb = min(tb, _round_up(B, 8))       # don't exceed (padded) batch

    # --- pad batch to a multiple of the tile, remember to slice back -------
    b_pad = _round_up(B, tb)
    if b_pad != B:
        x = jnp.pad(x, ((0, b_pad - B), (0, 0)))
    grid = (b_pad // tb,)

    # --- explicit VMEM limit: x double-buffer + w + out + headroom ---------
    vmem_needed = (2 * tb * H + 2 * H + 2 * tb) * elem_bytes
    vmem_limit = int(min(max(vmem_needed + (2 << 20), 16 << 20), 48 << 20))

    out = pl.pallas_call(
        critic_head_kernel,
        out_shape=jax.ShapeDtypeStruct((b_pad, 1), x.dtype),
        grid=grid,
        in_specs=[
            pl.BlockSpec((tb, H), lambda i: (i, 0)),                 # x stream
            pl.BlockSpec((H, 1), lambda i: (0, 0)),                  # resident w
            pl.BlockSpec(memory_space=pltpu.MemorySpace.SMEM),       # scalar bias
        ],
        out_specs=pl.BlockSpec((tb, 1), lambda i: (i, 0)),
        compiler_params=pltpu.CompilerParams(
            dimension_semantics=("parallel",),   # lets v7x shard tiles over 2 TCs
            vmem_limit_bytes=vmem_limit,
        ),
    )(x, w_t, b)
    return out[:B]


def init_params(input_size, key):
    # nn.init.orthogonal_ on a (1, input_size) weight -> unit-norm row vector.
    # Deterministic synthetic init (not a checkpoint load).
    w = jax.random.normal(key, (1, input_size), dtype=jnp.float32)
    w = w / jnp.linalg.norm(w)
    b = jnp.zeros((1,), dtype=jnp.float32)  # nn.init.constant_(bias, 0)
    return w, b


if __name__ == "__main__":
    key = jax.random.PRNGKey(0)
    k_x, k_w = jax.random.split(key)

    batch, input_size = 8, 32
    x = jax.random.normal(k_x, (batch, input_size), dtype=jnp.float32)
    w, b = init_params(input_size, k_w)

    out = critic_head(x, w.T, b.reshape(1, 1))
    out = jax.block_until_ready(out)

    ref = x @ w.T + b
    assert out.shape == (batch, 1)
    assert jnp.allclose(out, ref, atol=1e-5, rtol=1e-5)

    # Exercise the padded-batch path (B not a multiple of the tile rows).
    batch2 = 13
    x2 = jax.random.normal(k_x, (batch2, input_size), dtype=jnp.float32)
    out2 = jax.block_until_ready(critic_head(x2, w.T, b.reshape(1, 1)))
    ref2 = x2 @ w.T + b
    assert out2.shape == (batch2, 1)
    assert jnp.allclose(out2, ref2, atol=1e-5, rtol=1e-5)

    print("KERNEL_OK")
</pallas_src>

<mosaic_0001>
module attributes {stable_mosaic.version = 11 : i64} {
  func.func @critic_head_kernel(%arg0: i32, %arg1: memref<8x32xf32, #tpu.memory_space<vmem>>, %arg2: memref<32x1xf32, #tpu.memory_space<vmem>>, %arg3: memref<1x1xf32, #tpu.memory_space<smem>>, %arg4: memref<8x1xf32, #tpu.memory_space<vmem>>) attributes {dimension_semantics = [#tpu.dimension_semantics<parallel>], iteration_bounds = array<i64: 1>, scalar_prefetch = 0 : i64, scratch_operands = 0 : i64, tpu.core_type = #tpu.core_type<tc>, window_params = [{transform_indices = @transform_0, window_bounds = array<i64: 8, 32>}, {pipeline_mode = #tpu.pipeline_mode<synchronous>, transform_indices = @transform_1, window_bounds = array<i64: 32, 1>}, {transform_indices = @transform_2, window_bounds = array<i64: 1, 1>}, {transform_indices = @transform_3, window_bounds = array<i64: 8, 1>}]} {
    %c0 = arith.constant 0 : index
    %c0_0 = arith.constant 0 : index
    %0 = vector.load %arg1[%c0, %c0_0] : memref<8x32xf32, #tpu.memory_space<vmem>>, vector<8x32xf32>
    %c0_1 = arith.constant 0 : index
    %c0_2 = arith.constant 0 : index
    %1 = vector.load %arg2[%c0_1, %c0_2] : memref<32x1xf32, #tpu.memory_space<vmem>>, vector<32x1xf32>
    %cst = arith.constant dense<0.000000e+00> : vector<8x1xf32>
    %2 = tpu.matmul %0, %1, %cst {dimension_numbers = #tpu.dot_dimension_numbers<[1], [0], [0], [1], [0, 0, 1, 1], [], []>} : vector<8x32xf32>, vector<32x1xf32>, vector<8x1xf32> -> vector<8x1xf32>
    %c0_3 = arith.constant 0 : index
    %c0_4 = arith.constant 0 : index
    %3 = memref.load %arg3[%c0_3, %c0_4] : memref<1x1xf32, #tpu.memory_space<smem>>
    %4 = vector.broadcast %3 : f32 to vector<8x1xf32>
    %5 = arith.addf %2, %4 : vector<8x1xf32>
    %c0_5 = arith.constant 0 : index
    %c0_6 = arith.constant 0 : index
    %6 = vector.load %arg4[%c0_5, %c0_6] : memref<8x1xf32, #tpu.memory_space<vmem>>, vector<8x1xf32>
    tpu.vector_store %arg4[%c0_5, %c0_6], %5 {strides = array<i32>} : memref<8x1xf32, #tpu.memory_space<vmem>>, vector<8x1xf32>,
    return
  }
  func.func @transform_0(%arg0: i32) -> (i32, i32) {
    %c0_i32 = arith.constant 0 : i32
    %c0_i32_0 = arith.constant 0 : i32
    return %arg0, %c0_i32 : i32, i32
  }
  func.func @transform_1(%arg0: i32) -> (i32, i32) {
    %c0_i32 = arith.constant 0 : i32
    %c0_i32_0 = arith.constant 0 : i32
    %c0_i32_1 = arith.constant 0 : i32
    return %c0_i32, %c0_i32_0 : i32, i32
  }
  func.func @transform_2(%arg0: i32) -> (i32, i32) {
    %c0_i32 = arith.constant 0 : i32
    %c0_i32_0 = arith.constant 0 : i32
    %c0_i32_1 = arith.constant 0 : i32
    return %c0_i32, %c0_i32_0 : i32, i32
  }
  func.func @transform_3(%arg0: i32) -> (i32, i32) {
    %c0_i32 = arith.constant 0 : i32
    %c0_i32_0 = arith.constant 0 : i32
    return %arg0, %c0_i32 : i32, i32
  }
}

</mosaic_0001>

<llo_original>
// kernel: tpu_custom_call.1
$region0: #{tpu_custom_call.1}
  #allocation0 [shape = 'u32[]', space=smem, size = 0x4, offset = 0x4, fixed_abs, tag = 'smem constant byte address 0x4 - core index']
  #allocation1 [shape = 'u32[144,128]{1,0:T(1,128)}', space=vmem, size = 0x12000, scoped, tag = 'internal scratch']
  #allocation2 [shape = 'f32[1,1]{1,0:T(1,128)S(6)}', space=smem, size = 0x200, scoped, tag = 'scoped memory for tpu_custom_call.1']
  %s0 = inlined_call_operand.vmem [shape: f32[8,32], index: 0, kind: input, shape index: {}]
  %s1 = inlined_call_operand.vmem [shape: f32[32,1], index: 1, kind: input, shape index: {}]
  %s2 = inlined_call_operand.<no memory space> [shape: f32[1,1], index: 2, kind: input, shape index: {}]
  %s3 = inlined_call_operand.vmem [shape: f32[8,1], index: 3, kind: output, shape index: {}]
  %s4 = sld [smem:[#allocation0]]
  $region22: #{tpu_custom_call.1} parent=0
    _
  %s6 = ssub.s32 1, %s4
  %s7 = scalar_select 0, %s6, %s4
  %8 = sst [smem:[#allocation2]] %s2
  // Predicated region
  $region2: #{tpu_custom_call.1} parent=0 // pred_check
    _
  $region3: #{tpu_custom_call.1} parent=0 // pred_check_branch
    %10 = sbr.rel (0) target = $region5
  $region4: #{tpu_custom_call.1} parent=0 // pred_region
    _
  $region5: #{tpu_custom_call.1} parent=0 // pred_fallthru
    _
  // Predicated region
  $region6: #{tpu_custom_call.1} parent=0 // pred_check
    _
  $region7: #{tpu_custom_call.1} parent=0 // pred_check_branch
    %12 = sbr.rel (0) target = $region9
  $region8: #{tpu_custom_call.1} parent=0 // pred_region
    _
  $region9: #{tpu_custom_call.1} parent=0 // pred_fallthru
    _
  // Predicated region
  $region10: #{tpu_custom_call.1} parent=0 // pred_check
    _
  $region11: #{tpu_custom_call.1} parent=0 // pred_check_branch
    %14 = sbr.rel (0) target = $region13
  $region12: #{tpu_custom_call.1} parent=0 // pred_region
    _
  $region13: #{tpu_custom_call.1} parent=0 // pred_fallthru
    _
  %v15 = vld [vmem:[%s0] sm:$0xff]
  %v16 = vld [vmem:[%s1] sm:$0xff]
  %v17 = vld [vmem:[%s1 + $0x8] sm:$0xff]
  %v18 = vld [vmem:[%s1 + $0x10] sm:$0xff]
  %v19 = vld [vmem:[%s1 + $0x18] sm:$0xff]
  %s20 = sld [smem:[#allocation2]]
  %v21 = vstv %s20
  %vm22 = vcmask 261120
  %v24 = vsel %vm22, %v15, 0
  %26 = vmatprep.subr.mxu0 0.0
  %27 = vmatpush1.msra.mxu0 %v16
  %28 = vmatprep.subr.mxu0 0.0
  %29 = vmatpush1.msra.mxu0 %v17
  %30 = vmatprep.subr.mxu0 0.0
  %31 = vmatpush1.msra.mxu0 %v18
  %32 = vmatprep.subr.mxu0 0.0
  %33 = vmatpush1.msra.mxu0 %v19
  %34 = vmatprep.subr.mxu0 0.0
  %35 = vmatpush1.msra.mxu0 0.0
  %36 = vmatprep.subr.mxu0 0.0
  %37 = vmatpush1.msra.mxu0 0.0
  %38 = vmatprep.subr.mxu0 0.0
  %39 = vmatpush1.msra.mxu0 0.0
  %40 = vmatprep.subr.mxu0 0.0
  %41 = vmatpush1.msra.mxu0 0.0
  %42 = vmatprep.subr.mxu0 0.0
  %43 = vmatpush1.msra.mxu0 0.0
  %44 = vmatprep.subr.mxu0 0.0
  %45 = vmatpush1.msra.mxu0 0.0
  %46 = vmatprep.subr.mxu0 0.0
  %47 = vmatpush1.msra.mxu0 0.0
  %48 = vmatprep.subr.mxu0 0.0
  %49 = vmatpush1.msra.mxu0 0.0
  %50 = vmatprep.subr.mxu0 0.0
  %51 = vmatpush1.msra.mxu0 0.0
  %52 = vmatprep.subr.mxu0 0.0
  %53 = vmatpush1.msra.mxu0 0.0
  %54 = vmatprep.subr.mxu0 0.0
  %55 = vmatpush1.msra.mxu0 0.0
  %56 = vmatprep.subr.mxu0 0.0
  %57 = vmatpush1.msra.mxu0 0.0
  %58 = vmatprep.subr.mxu0 0.0
  %59 = vmatpush1.msra.mxu0 0.0
  %60 = vmatprep.subr.mxu0 0.0
  %61 = vmatpush1.msra.mxu0 0.0
  %62 = vmatprep.subr.mxu0 0.0
  %63 = vmatpush1.msra.mxu0 0.0
  %64 = vmatprep.subr.mxu0 0.0
  %65 = vmatpush1.msra.mxu0 0.0
  %66 = vmatprep.subr.mxu0 0.0
  %67 = vmatpush1.msra.mxu0 0.0
  %68 = vmatprep.subr.mxu0 0.0
  %69 = vmatpush1.msra.mxu0 0.0
  %70 = vmatprep.subr.mxu0 0.0
  %71 = vmatpush1.msra.mxu0 0.0
  %72 = vmatprep.subr.mxu0 0.0
  %73 = vmatpush1.msra.mxu0 0.0
  %74 = vmatprep.subr.mxu0 0.0
  %75 = vmatpush1.msra.mxu0 0.0
  %76 = vmatprep.subr.mxu0 0.0
  %77 = vmatpush1.msra.mxu0 0.0
  %78 = vmatprep.subr.mxu0 0.0
  %79 = vmatpush1.msra.mxu0 0.0
  %80 = vmatprep.subr.mxu0 0.0
  %81 = vmatpush1.msra.mxu0 0.0
  %82 = vmatprep.subr.mxu0 0.0
  %83 = vmatpush1.msra.mxu0 0.0
  %84 = vmatprep.subr.mxu0 0.0
  %85 = vmatpush1.msra.mxu0 0.0
  %86 = vmatprep.subr.mxu0 0.0
  %87 = vmatpush1.msra.mxu0 0.0
  %88 = vmatprep.subr.mxu0 0.0
  %89 = vmatpush1.msra.mxu0 0.0
  %90 = vmatprep.mubr.f32.mxu0 0.0
  %91 = vmatmul.mubr.f32.gmra.mrb[0].mxu0 %v24
  %v92 = vpop.f32.mrb[0].mxu0
  %v93 = vadd.f32 %v21, %v92
  %v94 = vpop.f32.mrb[0].mxu0
  %95 = vdwg.mxu0
  %vm96 = vcmask 7168
  %97 = vst.msk [vmem:[%s3] sm:$0xff] %vm96, %v93
  // Predicated region
  $region14: #{tpu_custom_call.1} parent=0 // pred_check
    _
  $region15: #{tpu_custom_call.1} parent=0 // pred_check_branch
    %99 = sbr.rel (0) target = $region17
  $region16: #{tpu_custom_call.1} parent=0 // pred_region
    _
  $region17: #{tpu_custom_call.1} parent=0 // pred_fallthru
    _
  // Predicated region
  $region18: #{tpu_custom_call.1} parent=0 // pred_check
    _
  $region19: #{tpu_custom_call.1} parent=0 // pred_check_branch
    %101 = sbr.rel (0) target = $region21
  $region20: #{tpu_custom_call.1} parent=0 // pred_region
    _
  $region21: #{tpu_custom_call.1} parent=0 // pred_fallthru
    _

</llo_original>
